<compile_context>
chip_gen: v7x
topology: tpu7x:2x2x1
jax: 0.10.0
libtpu: 0.0.40
codegen_flags: <defaults>
</compile_context>

<pallas_src>
import numpy as np
import jax
import jax.numpy as jnp
from jax.experimental import pallas as pl
from jax.experimental.pallas import tpu as pltpu

BN_EPS = 1e-5  # nn.BatchNorm2d default


# =============================== Pallas kernels ===============================

def _stage1_kernel(p1_ref, w1_ref, s1_ref, b1_ref, w2_ref, s2_ref, b2_ref,
                   y1_ref, y2_ref):
    """cv1 (as im2col matmul) + BN + SiLU, then cv2 (1x1) + BN + SiLU."""
    p = p1_ref[...]                                                   # (tm, 9*c1)
    y1 = jnp.dot(p, w1_ref[...], preferred_element_type=jnp.float32)  # (tm, c_)
    y1 = y1 * s1_ref[...] + b1_ref[...]                               # folded BN
    y1 = y1 * jax.nn.sigmoid(y1)                                      # SiLU
    y1_ref[...] = y1.astype(y1_ref.dtype)

    y2 = jnp.dot(y1, w2_ref[...], preferred_element_type=jnp.float32)
    y2 = y2 * s2_ref[...] + b2_ref[...]
    y2 = y2 * jax.nn.sigmoid(y2)
    y2_ref[...] = y2.astype(y2_ref.dtype)


def _stage2_kernel(p3_ref, pool_ref, w3_ref, s3_ref, b3_ref,
                   w4a_ref, w4b_ref, s4_ref, b4_ref, o_ref):
    """cv3 (im2col matmul)+BN+SiLU, 2x2 maxpool taps, cv4 (split 1x1)+BN+SiLU."""
    y3 = jnp.dot(p3_ref[...], w3_ref[...],
                 preferred_element_type=jnp.float32)                  # (tm, c_)
    y3 = y3 * s3_ref[...] + b3_ref[...]
    y3 = y3 * jax.nn.sigmoid(y3)

    # max-pool: elementwise max of the four 2x2 window taps (pure VPU work)
    pooled = jnp.maximum(jnp.maximum(pool_ref[0], pool_ref[1]),
                         jnp.maximum(pool_ref[2], pool_ref[3]))       # (tm, c_)

    # cv4 on cat([y3, pooled]) without a lane concat: split-weight matmuls.
    o = (jnp.dot(y3, w4a_ref[...], preferred_element_type=jnp.float32)
         + jnp.dot(pooled, w4b_ref[...], preferred_element_type=jnp.float32))
    o = o * s4_ref[...] + b4_ref[...]
    o_ref[...] = (o * jax.nn.sigmoid(o)).astype(o_ref.dtype)


# ============================ tiling / glue helpers ===========================

def _round_up(x, m):
    return (x + m - 1) // m * m


def _rows_tiling(rows, max_tm=512):
    """Pick a large row tile; >=2 grid steps when big enough (v7x megacore)."""
    rows_p = _round_up(rows, 8)
    if rows_p > max_tm:
        tm = max_tm
    elif rows_p >= 128 and rows_p % 16 == 0:
        tm = rows_p // 2
    else:
        tm = rows_p
    rows_p = _round_up(rows_p, tm)
    return rows_p, tm


def _im2col_3x3_s2(x_nhwc):
    """3x3, stride 2, pad 1 patches -> (B*Ho*Wo, 9*C) rows (channels innermost)."""
    B, H, W, C = x_nhwc.shape
    Ho = (H - 1) // 2 + 1
    Wo = (W - 1) // 2 + 1
    xp = jnp.pad(x_nhwc, ((0, 0), (1, 1), (1, 1), (0, 0)))
    cols = []
    for dy in range(3):
        for dx in range(3):
            cols.append(xp[:, dy:dy + 2 * (Ho - 1) + 1:2,
                           dx:dx + 2 * (Wo - 1) + 1:2, :])            # (B,Ho,Wo,C)
    patches = jnp.concatenate(cols, axis=-1)                          # (B,Ho,Wo,9C)
    return patches.reshape(B * Ho * Wo, 9 * C), (B, Ho, Wo)


# ============================== pallas_call wrappers ==========================

def _stage1_pallas(patches1, w1m, s1, b1, w2m, s2, b2, c_):
    rows, K1 = patches1.shape
    rows_p, tm = _rows_tiling(rows)
    if rows_p != rows:
        patches1 = jnp.pad(patches1, ((0, rows_p - rows), (0, 0)))
    y1, y2 = pl.pallas_call(
        _stage1_kernel,
        out_shape=(jax.ShapeDtypeStruct((rows_p, c_), jnp.float32),
                   jax.ShapeDtypeStruct((rows_p, c_), jnp.float32)),
        grid=(rows_p // tm,),
        in_specs=[
            pl.BlockSpec((tm, K1), lambda i: (i, 0)),     # im2col rows
            pl.BlockSpec((K1, c_), lambda i: (0, 0)),     # cv1 weight (9c1, c_)
            pl.BlockSpec((1, c_), lambda i: (0, 0)),      # cv1 BN scale
            pl.BlockSpec((1, c_), lambda i: (0, 0)),      # cv1 BN bias
            pl.BlockSpec((c_, c_), lambda i: (0, 0)),     # cv2 weight
            pl.BlockSpec((1, c_), lambda i: (0, 0)),      # cv2 BN scale
            pl.BlockSpec((1, c_), lambda i: (0, 0)),      # cv2 BN bias
        ],
        out_specs=[pl.BlockSpec((tm, c_), lambda i: (i, 0)),
                   pl.BlockSpec((tm, c_), lambda i: (i, 0))],
        compiler_params=pltpu.CompilerParams(dimension_semantics=("parallel",)),
    )(patches1, w1m, s1.reshape(1, -1), b1.reshape(1, -1),
      w2m, s2.reshape(1, -1), b2.reshape(1, -1))
    return y1[:rows], y2[:rows]


def _stage2_pallas(patches3, pool_taps, w3m, s3, b3, w4a, w4b, s4, b4, c_, c2):
    rows, K3 = patches3.shape
    rows_p, tm = _rows_tiling(rows)
    if rows_p != rows:
        patches3 = jnp.pad(patches3, ((0, rows_p - rows), (0, 0)))
        pool_taps = jnp.pad(pool_taps, ((0, 0), (0, rows_p - rows), (0, 0)))
    out = pl.pallas_call(
        _stage2_kernel,
        out_shape=jax.ShapeDtypeStruct((rows_p, c2), jnp.float32),
        grid=(rows_p // tm,),
        in_specs=[
            pl.BlockSpec((tm, K3), lambda i: (i, 0)),      # im2col rows for cv3
            pl.BlockSpec((4, tm, c_), lambda i: (0, i, 0)),# 2x2 pool taps of cv1 out
            pl.BlockSpec((K3, c_), lambda i: (0, 0)),      # cv3 weight (9c_, c_)
            pl.BlockSpec((1, c_), lambda i: (0, 0)),       # cv3 BN scale
            pl.BlockSpec((1, c_), lambda i: (0, 0)),       # cv3 BN bias
            pl.BlockSpec((c_, c2), lambda i: (0, 0)),      # cv4 weight (top half)
            pl.BlockSpec((c_, c2), lambda i: (0, 0)),      # cv4 weight (bottom half)
            pl.BlockSpec((1, c2), lambda i: (0, 0)),       # cv4 BN scale
            pl.BlockSpec((1, c2), lambda i: (0, 0)),       # cv4 BN bias
        ],
        out_specs=pl.BlockSpec((tm, c2), lambda i: (i, 0)),
        compiler_params=pltpu.CompilerParams(dimension_semantics=("parallel",)),
    )(patches3, pool_taps, w3m, s3.reshape(1, -1), b3.reshape(1, -1),
      w4a, w4b, s4.reshape(1, -1), b4.reshape(1, -1))
    return out[:rows]


# ================================ forward pass ================================

def stem_forward(x_nchw, p):
    """Stem forward.  Input/output layout: NCHW float32."""
    B, C1, H, W = x_nchw.shape
    c2 = p['w4'].shape[0]
    c_ = c2 // 2

    x = jnp.transpose(x_nchw, (0, 2, 3, 1))                          # NHWC

    # ---- stage 1: cv1 (3x3 s2) + cv2 (1x1), fused in one kernel -------------
    patches1, (_, Ho1, Wo1) = _im2col_3x3_s2(x)
    w1m = jnp.transpose(p['w1'], (2, 3, 1, 0)).reshape(9 * C1, c_)   # (kh,kw,ci,co)
    w2m = jnp.transpose(p['w2'][:, :, 0, 0], (1, 0))                 # (ci, co)
    y1, y2 = _stage1_pallas(patches1, w1m, p['s1'], p['b1'],
                            w2m, p['s2'], p['b2'], c_)
    y1_sp = y1.reshape(B, Ho1, Wo1, c_)                              # cv1 output
    y2_sp = y2.reshape(B, Ho1, Wo1, c_)                              # cv2 output

    # ---- stage 2: cv3 (3x3 s2) + maxpool(cv1) + cv4 (1x1), fused ------------
    patches3, (_, Ho2, Wo2) = _im2col_3x3_s2(y2_sp)
    # 2x2 / stride-2 pool taps of cv1 output, laid out as (4, rows, c_)
    pool_taps = (y1_sp.reshape(B, Ho2, 2, Wo2, 2, c_)
                 .transpose(2, 4, 0, 1, 3, 5)
                 .reshape(4, B * Ho2 * Wo2, c_))
    w3m = jnp.transpose(p['w3'], (2, 3, 1, 0)).reshape(9 * c_, c_)
    w4m = jnp.transpose(p['w4'][:, :, 0, 0], (1, 0))                 # (2c_, c2)
    out_rows = _stage2_pallas(patches3, pool_taps, w3m, p['s3'], p['b3'],
                              w4m[:c_], w4m[c_:], p['s4'], p['b4'], c_, c2)

    out = out_rows.reshape(B, Ho2, Wo2, c2).transpose(0, 3, 1, 2)    # NCHW
    return out


# ============================== pure-JAX reference ============================

def _conv_bn_silu_ref(x_nchw, w, scale, bias, stride, pad):
    y = jax.lax.conv_general_dilated(
        x_nchw, w, window_strides=(stride, stride),
        padding=((pad, pad), (pad, pad)),
        dimension_numbers=('NCHW', 'OIHW', 'NCHW'))
    y = y * scale[None, :, None, None] + bias[None, :, None, None]
    return y * jax.nn.sigmoid(y)


def stem_ref(x_nchw, p):
    y1 = _conv_bn_silu_ref(x_nchw, p['w1'], p['s1'], p['b1'], 2, 1)
    y2 = _conv_bn_silu_ref(y1, p['w2'], p['s2'], p['b2'], 1, 0)
    y3 = _conv_bn_silu_ref(y2, p['w3'], p['s3'], p['b3'], 2, 1)
    pooled = jax.lax.reduce_window(y1, -jnp.inf, jax.lax.max,
                                   (1, 1, 2, 2), (1, 1, 2, 2), 'VALID')
    cat = jnp.concatenate([y3, pooled], axis=1)
    return _conv_bn_silu_ref(cat, p['w4'], p['s4'], p['b4'], 1, 0)


# ================================ parameters ==================================

def init_params(key, c1, c2):
    c_ = c2 // 2
    ks = jax.random.split(key, 8)

    def conv_w(k, cout, cin, kh, kw):
        fan = cin * kh * kw
        return jax.random.normal(k, (cout, cin, kh, kw), jnp.float32) / np.sqrt(fan)

    def bn_fold(k, c):
        kg, kb, km, kv = jax.random.split(k, 4)
        gamma = 1.0 + 0.1 * jax.random.normal(kg, (c,), jnp.float32)
        beta = 0.05 * jax.random.normal(kb, (c,), jnp.float32)
        mean = 0.1 * jax.random.normal(km, (c,), jnp.float32)
        var = 0.5 + jnp.abs(jax.random.normal(kv, (c,), jnp.float32))
        scale = gamma * jax.lax.rsqrt(var + BN_EPS)
        bias = beta - mean * scale
        return scale, bias

    p = {}
    p['w1'] = conv_w(ks[0], c_, c1, 3, 3)
    p['s1'], p['b1'] = bn_fold(ks[1], c_)
    p['w2'] = conv_w(ks[2], c_, c_, 1, 1)
    p['s2'], p['b2'] = bn_fold(ks[3], c_)
    p['w3'] = conv_w(ks[4], c_, c_, 3, 3)
    p['s3'], p['b3'] = bn_fold(ks[5], c_)
    p['w4'] = conv_w(ks[6], c2, 2 * c_, 1, 1)
    p['s4'], p['b4'] = bn_fold(ks[7], c2)
    return p


# =================================== main =====================================

if __name__ == "__main__":
    key = jax.random.PRNGKey(0)
    kx, kp = jax.random.split(key)

    C1, C2 = 4, 32                      # Stem(c1=4, c2=32) -> c_ = 16
    x = jax.random.normal(kx, (2, C1, 16, 16), jnp.float32)
    params = init_params(kp, C1, C2)

    out = jax.block_until_ready(stem_forward(x, params))
    ref = jax.block_until_ready(stem_ref(x, params))

    assert out.shape == (2, C2, 4, 4) and out.dtype == jnp.float32
    if not np.allclose(np.asarray(out), np.asarray(ref), rtol=2e-2, atol=2e-2):
        raise SystemExit("Pallas output does not match reference")
    print("KERNEL_OK")
</pallas_src>

<mosaic_0001>
module attributes {stable_mosaic.version = 11 : i64} {
  func.func @_stage1_kernel(%arg0: i32, %arg1: memref<64x36xf32, #tpu.memory_space<vmem>>, %arg2: memref<36x16xf32, #tpu.memory_space<vmem>>, %arg3: memref<1x16xf32, #tpu.memory_space<vmem>>, %arg4: memref<1x16xf32, #tpu.memory_space<vmem>>, %arg5: memref<16x16xf32, #tpu.memory_space<vmem>>, %arg6: memref<1x16xf32, #tpu.memory_space<vmem>>, %arg7: memref<1x16xf32, #tpu.memory_space<vmem>>, %arg8: memref<64x16xf32, #tpu.memory_space<vmem>>, %arg9: memref<64x16xf32, #tpu.memory_space<vmem>>) attributes {dimension_semantics = [#tpu.dimension_semantics<parallel>], iteration_bounds = array<i64: 2>, scalar_prefetch = 0 : i64, scratch_operands = 0 : i64, tpu.core_type = #tpu.core_type<tc>, window_params = [{transform_indices = @transform_0, window_bounds = array<i64: 64, 36>}, {pipeline_mode = #tpu.pipeline_mode<synchronous>, transform_indices = @transform_1, window_bounds = array<i64: 36, 16>}, {pipeline_mode = #tpu.pipeline_mode<synchronous>, transform_indices = @transform_2, window_bounds = array<i64: 1, 16>}, {pipeline_mode = #tpu.pipeline_mode<synchronous>, transform_indices = @transform_3, window_bounds = array<i64: 1, 16>}, {pipeline_mode = #tpu.pipeline_mode<synchronous>, transform_indices = @transform_4, window_bounds = array<i64: 16, 16>}, {pipeline_mode = #tpu.pipeline_mode<synchronous>, transform_indices = @transform_5, window_bounds = array<i64: 1, 16>}, {pipeline_mode = #tpu.pipeline_mode<synchronous>, transform_indices = @transform_6, window_bounds = array<i64: 1, 16>}, {transform_indices = @transform_7, window_bounds = array<i64: 64, 16>}, {transform_indices = @transform_8, window_bounds = array<i64: 64, 16>}]} {
    %c0 = arith.constant 0 : index
    %c0_0 = arith.constant 0 : index
    %0 = vector.load %arg1[%c0, %c0_0] : memref<64x36xf32, #tpu.memory_space<vmem>>, vector<64x36xf32>
    %c0_1 = arith.constant 0 : index
    %c0_2 = arith.constant 0 : index
    %1 = vector.load %arg2[%c0_1, %c0_2] : memref<36x16xf32, #tpu.memory_space<vmem>>, vector<36x16xf32>
    %cst = arith.constant dense<0.000000e+00> : vector<64x16xf32>
    %2 = tpu.matmul %0, %1, %cst {dimension_numbers = #tpu.dot_dimension_numbers<[1], [0], [0], [1], [0, 0, 1, 1], [], []>} : vector<64x36xf32>, vector<36x16xf32>, vector<64x16xf32> -> vector<64x16xf32>
    %c0_3 = arith.constant 0 : index
    %c0_4 = arith.constant 0 : index
    %3 = vector.load %arg3[%c0_3, %c0_4] : memref<1x16xf32, #tpu.memory_space<vmem>>, vector<1x16xf32>
    %4 = vector.broadcast %3 : vector<1x16xf32> to vector<64x16xf32>
    %5 = arith.mulf %2, %4 : vector<64x16xf32>
    %c0_5 = arith.constant 0 : index
    %c0_6 = arith.constant 0 : index
    %6 = vector.load %arg4[%c0_5, %c0_6] : memref<1x16xf32, #tpu.memory_space<vmem>>, vector<1x16xf32>
    %7 = vector.broadcast %6 : vector<1x16xf32> to vector<64x16xf32>
    %8 = arith.addf %5, %7 : vector<64x16xf32>
    %9 = arith.negf %8 : vector<64x16xf32>
    %10 = math.exp %9 : vector<64x16xf32>
    %cst_7 = arith.constant 1.000000e+00 : f32
    %11 = vector.broadcast %cst_7 : f32 to vector<64x16xf32>
    %12 = arith.addf %11, %10 : vector<64x16xf32>
    %13 = arith.divf %11, %12 : vector<64x16xf32>
    %14 = arith.mulf %8, %13 : vector<64x16xf32>
    %c0_8 = arith.constant 0 : index
    %c0_9 = arith.constant 0 : index
    %15 = vector.load %arg8[%c0_8, %c0_9] : memref<64x16xf32, #tpu.memory_space<vmem>>, vector<64x16xf32>
    tpu.vector_store %arg8[%c0_8, %c0_9], %14 {strides = array<i32>} : memref<64x16xf32, #tpu.memory_space<vmem>>, vector<64x16xf32>,
    %c0_10 = arith.constant 0 : index
    %c0_11 = arith.constant 0 : index
    %16 = vector.load %arg5[%c0_10, %c0_11] : memref<16x16xf32, #tpu.memory_space<vmem>>, vector<16x16xf32>
    %cst_12 = arith.constant dense<0.000000e+00> : vector<64x16xf32>
    %17 = tpu.matmul %14, %16, %cst_12 {dimension_numbers = #tpu.dot_dimension_numbers<[1], [0], [0], [1], [0, 0, 1, 1], [], []>} : vector<64x16xf32>, vector<16x16xf32>, vector<64x16xf32> -> vector<64x16xf32>
    %c0_13 = arith.constant 0 : index
    %c0_14 = arith.constant 0 : index
    %18 = vector.load %arg6[%c0_13, %c0_14] : memref<1x16xf32, #tpu.memory_space<vmem>>, vector<1x16xf32>
    %19 = vector.broadcast %18 : vector<1x16xf32> to vector<64x16xf32>
    %20 = arith.mulf %17, %19 : vector<64x16xf32>
    %c0_15 = arith.constant 0 : index
    %c0_16 = arith.constant 0 : index
    %21 = vector.load %arg7[%c0_15, %c0_16] : memref<1x16xf32, #tpu.memory_space<vmem>>, vector<1x16xf32>
    %22 = vector.broadcast %21 : vector<1x16xf32> to vector<64x16xf32>
    %23 = arith.addf %20, %22 : vector<64x16xf32>
    %24 = arith.negf %23 : vector<64x16xf32>
    %25 = math.exp %24 : vector<64x16xf32>
    %cst_17 = arith.constant 1.000000e+00 : f32
    %26 = vector.broadcast %cst_17 : f32 to vector<64x16xf32>
    %27 = arith.addf %26, %25 : vector<64x16xf32>
    %28 = arith.divf %26, %27 : vector<64x16xf32>
    %29 = arith.mulf %23, %28 : vector<64x16xf32>
    %c0_18 = arith.constant 0 : index
    %c0_19 = arith.constant 0 : index
    %30 = vector.load %arg9[%c0_18, %c0_19] : memref<64x16xf32, #tpu.memory_space<vmem>>, vector<64x16xf32>
    tpu.vector_store %arg9[%c0_18, %c0_19], %29 {strides = array<i32>} : memref<64x16xf32, #tpu.memory_space<vmem>>, vector<64x16xf32>,
    return
  }
  func.func @transform_0(%arg0: i32) -> (i32, i32) {
    %c0_i32 = arith.constant 0 : i32
    %c0_i32_0 = arith.constant 0 : i32
    return %arg0, %c0_i32 : i32, i32
  }
  func.func @transform_1(%arg0: i32) -> (i32, i32) {
    %c0_i32 = arith.constant 0 : i32
    %c0_i32_0 = arith.constant 0 : i32
    %c0_i32_1 = arith.constant 0 : i32
    return %c0_i32, %c0_i32_0 : i32, i32
  }
  func.func @transform_2(%arg0: i32) -> (i32, i32) {
    %c0_i32 = arith.constant 0 : i32
    %c0_i32_0 = arith.constant 0 : i32
    %c0_i32_1 = arith.constant 0 : i32
    return %c0_i32, %c0_i32_0 : i32, i32
  }
  func.func @transform_3(%arg0: i32) -> (i32, i32) {
    %c0_i32 = arith.constant 0 : i32
    %c0_i32_0 = arith.constant 0 : i32
    %c0_i32_1 = arith.constant 0 : i32
    return %c0_i32, %c0_i32_0 : i32, i32
  }
  func.func @transform_4(%arg0: i32) -> (i32, i32) {
    %c0_i32 = arith.constant 0 : i32
    %c0_i32_0 = arith.constant 0 : i32
    %c0_i32_1 = arith.constant 0 : i32
    return %c0_i32, %c0_i32_0 : i32, i32
  }
  func.func @transform_5(%arg0: i32) -> (i32, i32) {
    %c0_i32 = arith.constant 0 : i32
    %c0_i32_0 = arith.constant 0 : i32
    %c0_i32_1 = arith.constant 0 : i32
    return %c0_i32, %c0_i32_0 : i32, i32
  }
  func.func @transform_6(%arg0: i32) -> (i32, i32) {
    %c0_i32 = arith.constant 0 : i32
    %c0_i32_0 = arith.constant 0 : i32
    %c0_i32_1 = arith.constant 0 : i32
    return %c0_i32, %c0_i32_0 : i32, i32
  }
  func.func @transform_7(%arg0: i32) -> (i32, i32) {
    %c0_i32 = arith.constant 0 : i32
    %c0_i32_0 = arith.constant 0 : i32
    return %arg0, %c0_i32 : i32, i32
  }
  func.func @transform_8(%arg0: i32) -> (i32, i32) {
    %c0_i32 = arith.constant 0 : i32
    %c0_i32_0 = arith.constant 0 : i32
    return %arg0, %c0_i32 : i32, i32
  }
}

</mosaic_0001>

<llo_original>
// kernel: tpu_custom_call.1
$region0: #{tpu_custom_call.1}
  #allocation0 [shape = 'u32[]', space=smem, size = 0x4, offset = 0x4, fixed_abs, tag = 'smem constant byte address 0x4 - core index']
  #allocation1 [shape = 'u32[144,128]{1,0:T(1,128)}', space=vmem, size = 0x12000, scoped, tag = 'internal scratch']
  %s0 = inlined_call_operand.vmem [shape: f32[128,36], index: 0, kind: input, shape index: {}]
  %s1 = inlined_call_operand.vmem [shape: f32[36,16], index: 1, kind: input, shape index: {}]
  %s2 = inlined_call_operand.vmem [shape: f32[1,16], index: 2, kind: input, shape index: {}]
  %s3 = inlined_call_operand.vmem [shape: f32[1,16], index: 3, kind: input, shape index: {}]
  %s4 = inlined_call_operand.vmem [shape: f32[16,16], index: 4, kind: input, shape index: {}]
  %s5 = inlined_call_operand.vmem [shape: f32[1,16], index: 5, kind: input, shape index: {}]
  %s6 = inlined_call_operand.vmem [shape: f32[1,16], index: 6, kind: input, shape index: {}]
  %s7 = inlined_call_operand.vmem [shape: f32[128,16], index: 7, kind: output, shape index: {0}]
  %s8 = inlined_call_operand.vmem [shape: f32[128,16], index: 8, kind: output, shape index: {1}]
  %9 = xla_tuple %s7, %s8
  %s10 = sld [smem:[#allocation0]]
  $region69: #{tpu_custom_call.1} parent=0
    _
  %s12 = ssub.s32 1, %s10
  %s13 = scalar_select 0, %s12, %s10
  loop: start=0, step=1, limit=4
  $region2: #{tpu_custom_call.1} parent=0 // loop_pre_header
    _
  $region3: #{tpu_custom_call.1} parent=0 // loop_header
    %s15 = sphi 0, %s19
    %p16 = scmp.ge.s32.totalorder %s15, 4
    %s25 = sphi 0, %s27
    %s28 = sphi 0, %s25
    %s29 = sphi 0, %s28
    %s45 = sphi 0, %s29
    %s49 = sphi 0, %s49
    %s51 = sphi 0, %s49
    %s52 = sphi 0, %s51
    %s66 = sphi 0, %s52
    %s70 = sphi 0, %s70
    %s72 = sphi 0, %s70
    %s73 = sphi 0, %s72
    %s87 = sphi 0, %s73
    %s91 = sphi 0, %s91
    %s93 = sphi 0, %s91
    %s94 = sphi 0, %s93
    %s108 = sphi 0, %s94
    %s112 = sphi 0, %s112
    %s114 = sphi 0, %s112
    %s115 = sphi 0, %s114
    %s129 = sphi 0, %s115
    %s133 = sphi 0, %s133
    %s135 = sphi 0, %s133
    %s136 = sphi 0, %s135
    %s150 = sphi 0, %s136
    %s154 = sphi 0, %s154
    %s156 = sphi 0, %s154
    %s157 = sphi 0, %s156
    %s171 = sphi 0, %s157
    %s177 = sphi 0, %s179
    %s180 = sphi 0, %s177
    %s181 = sphi 0, %s180
    %s197 = sphi 0, %s181
    %s203 = sphi 0, %s205
    %s206 = sphi 0, %s203
    %s207 = sphi 0, %s206
    %s223 = sphi 0, %s207
  $region4: #{tpu_custom_call.1} parent=0 // loop_header_branch
    %18 = sbr.rel (%p16) target = $region8
  $region5: #{tpu_custom_call.1} parent=0 // loop_body
    %s20 = ssub.s32 %s15, 1
    %s21 = ssub.s32 %s15, 2
    %s22 = sadd.s32 %s15, 1
    %s23 = ssub.s32 %s15, %s22
    %p24 = scmp.eq.s32.totalorder %s23, 0
    %s26 = sadd.s32 %s25, 1
    %s27 = scalar_select %p24, %s25, %s26
    %p30 = pneg %p24
    %p31 = scmp.eq.s32.totalorder %s15, 1
    %p32 = por %p30, %p31
    %p33 = scmp.ne.s32.totalorder %s25, %s28
    %p34 = scmp.eq.s32.totalorder %s15, 0
    %p35 = por %p33, %p34
    %p36 = scmp.ne.s32.totalorder %s25, %s28
    %p37 = scmp.eq.s32.totalorder %s20, 1
    %p38 = por %p36, %p37
    %p39 = scmp.ne.s32.totalorder %s28, %s29
    %p40 = scmp.eq.s32.totalorder %s20, 0
    %p41 = por %p39, %p40
    %p42 = scmp.ne.s32.totalorder %s28, %s29
    %p43 = scmp.eq.s32.totalorder %s21, 1
    %p44 = por %p42, %p43
    %p46 = scmp.ne.s32.totalorder %s29, %s45
    %p47 = scmp.eq.s32.totalorder %s21, 0
    %p48 = por %p46, %p47
    %s50 = sadd.s32 %s49, 1
    %p53 = scmp.eq.s32.totalorder %s15, 1
    %p54 = scmp.ne.s32.totalorder %s49, %s51
    %p55 = scmp.eq.s32.totalorder %s15, 0
    %p56 = por %p54, %p55
    %p57 = scmp.ne.s32.totalorder %s49, %s51
    %p58 = scmp.eq.s32.totalorder %s20, 1
    %p59 = por %p57, %p58
    %p60 = scmp.ne.s32.totalorder %s51, %s52
    %p61 = scmp.eq.s32.totalorder %s20, 0
    %p62 = por %p60, %p61
    %p63 = scmp.ne.s32.totalorder %s51, %s52
    %p64 = scmp.eq.s32.totalorder %s21, 1
    %p65 = por %p63, %p64
    %p67 = scmp.ne.s32.totalorder %s52, %s66
    %p68 = scmp.eq.s32.totalorder %s21, 0
    %p69 = por %p67, %p68
    %s71 = sadd.s32 %s70, 1
    %p74 = scmp.eq.s32.totalorder %s15, 1
    %p75 = scmp.ne.s32.totalorder %s70, %s72
    %p76 = scmp.eq.s32.totalorder %s15, 0
    %p77 = por %p75, %p76
    %p78 = scmp.ne.s32.totalorder %s70, %s72
    %p79 = scmp.eq.s32.totalorder %s20, 1
    %p80 = por %p78, %p79
    %p81 = scmp.ne.s32.totalorder %s72, %s73
    %p82 = scmp.eq.s32.totalorder %s20, 0
    %p83 = por %p81, %p82
    %p84 = scmp.ne.s32.totalorder %s72, %s73
    %p85 = scmp.eq.s32.totalorder %s21, 1
    %p86 = por %p84, %p85
    %p88 = scmp.ne.s32.totalorder %s73, %s87
    %p89 = scmp.eq.s32.totalorder %s21, 0
    %p90 = por %p88, %p89
    %s92 = sadd.s32 %s91, 1
    %p95 = scmp.eq.s32.totalorder %s15, 1
    %p96 = scmp.ne.s32.totalorder %s91, %s93
    %p97 = scmp.eq.s32.totalorder %s15, 0
    %p98 = por %p96, %p97
    %p99 = scmp.ne.s32.totalorder %s91, %s93
    %p100 = scmp.eq.s32.totalorder %s20, 1
    %p101 = por %p99, %p100
    %p102 = scmp.ne.s32.totalorder %s93, %s94
    %p103 = scmp.eq.s32.totalorder %s20, 0
    %p104 = por %p102, %p103
    %p105 = scmp.ne.s32.totalorder %s93, %s94
    %p106 = scmp.eq.s32.totalorder %s21, 1
    %p107 = por %p105, %p106
    %p109 = scmp.ne.s32.totalorder %s94, %s108
    %p110 = scmp.eq.s32.totalorder %s21, 0
    %p111 = por %p109, %p110
    %s113 = sadd.s32 %s112, 1
    %p116 = scmp.eq.s32.totalorder %s15, 1
    %p117 = scmp.ne.s32.totalorder %s112, %s114
    %p118 = scmp.eq.s32.totalorder %s15, 0
    %p119 = por %p117, %p118
    %p120 = scmp.ne.s32.totalorder %s112, %s114
    %p121 = scmp.eq.s32.totalorder %s20, 1
    %p122 = por %p120, %p121
    %p123 = scmp.ne.s32.totalorder %s114, %s115
    %p124 = scmp.eq.s32.totalorder %s20, 0
    %p125 = por %p123, %p124
    %p126 = scmp.ne.s32.totalorder %s114, %s115
    %p127 = scmp.eq.s32.totalorder %s21, 1
    %p128 = por %p126, %p127
    %p130 = scmp.ne.s32.totalorder %s115, %s129
    %p131 = scmp.eq.s32.totalorder %s21, 0
    %p132 = por %p130, %p131
    %s134 = sadd.s32 %s133, 1
    %p137 = scmp.eq.s32.totalorder %s15, 1
    %p138 = scmp.ne.s32.totalorder %s133, %s135
    %p139 = scmp.eq.s32.totalorder %s15, 0
    %p140 = por %p138, %p139
    %p141 = scmp.ne.s32.totalorder %s133, %s135
    %p142 = scmp.eq.s32.totalorder %s20, 1
    %p143 = por %p141, %p142
    %p144 = scmp.ne.s32.totalorder %s135, %s136
    %p145 = scmp.eq.s32.totalorder %s20, 0
    %p146 = por %p144, %p145
    %p147 = scmp.ne.s32.totalorder %s135, %s136
    %p148 = scmp.eq.s32.totalorder %s21, 1
    %p149 = por %p147, %p148
    %p151 = scmp.ne.s32.totalorder %s136, %s150
    %p152 = scmp.eq.s32.totalorder %s21, 0
    %p153 = por %p151, %p152
    %s155 = sadd.s32 %s154, 1
    %p158 = scmp.eq.s32.totalorder %s15, 1
    %p159 = scmp.ne.s32.totalorder %s154, %s156
    %p160 = scmp.eq.s32.totalorder %s15, 0
    %p161 = por %p159, %p160
    %p162 = scmp.ne.s32.totalorder %s154, %s156
    %p163 = scmp.eq.s32.totalorder %s20, 1
    %p164 = por %p162, %p163
    %p165 = scmp.ne.s32.totalorder %s156, %s157
    %p166 = scmp.eq.s32.totalorder %s20, 0
    %p167 = por %p165, %p166
    %p168 = scmp.ne.s32.totalorder %s156, %s157
    %p169 = scmp.eq.s32.totalorder %s21, 1
    %p170 = por %p168, %p169
    %p172 = scmp.ne.s32.totalorder %s157, %s171
    %p173 = scmp.eq.s32.totalorder %s21, 0
    %p174 = por %p172, %p173
    %s175 = ssub.s32 %s15, %s22
    %p176 = scmp.eq.s32.totalorder %s175, 0
    %s178 = sadd.s32 %s177, 1
    %s179 = scalar_select %p176, %s177, %s178
    %p182 = pneg %p176
    %p183 = scmp.eq.s32.totalorder %s15, 1
    %p184 = por %p182, %p183
    %p185 = scmp.ne.s32.totalorder %s177, %s180
    %p186 = scmp.eq.s32.totalorder %s15, 0
    %p187 = por %p185, %p186
    %p188 = scmp.ne.s32.totalorder %s177, %s180
    %p189 = scmp.eq.s32.totalorder %s20, 1
    %p190 = por %p188, %p189
    %p191 = scmp.ne.s32.totalorder %s180, %s181
    %p192 = scmp.eq.s32.totalorder %s20, 0
    %p193 = por %p191, %p192
    %p194 = scmp.ne.s32.totalorder %s180, %s181
    %p195 = scmp.eq.s32.totalorder %s21, 1
    %p196 = por %p194, %p195
    %p198 = scmp.ne.s32.totalorder %s181, %s197
    %p199 = scmp.eq.s32.totalorder %s21, 0
    %p200 = por %p198, %p199
    %s201 = ssub.s32 %s15, %s22
    %p202 = scmp.eq.s32.totalorder %s201, 0
    %s204 = sadd.s32 %s203, 1
    %s205 = scalar_select %p202, %s203, %s204
    %p208 = pneg %p202
    %p209 = scmp.eq.s32.totalorder %s15, 1
    %p210 = por %p208, %p209
    %p211 = scmp.ne.s32.totalorder %s203, %s206
    %p212 = scmp.eq.s32.totalorder %s15, 0
    %p213 = por %p211, %p212
    %p214 = scmp.ne.s32.totalorder %s203, %s206
    %p215 = scmp.eq.s32.totalorder %s20, 1
    %p216 = por %p214, %p215
    %p217 = scmp.ne.s32.totalorder %s206, %s207
    %p218 = scmp.eq.s32.totalorder %s20, 0
    %p219 = por %p217, %p218
    %p220 = scmp.ne.s32.totalorder %s206, %s207
    %p221 = scmp.eq.s32.totalorder %s21, 1
    %p222 = por %p220, %p221
    %p224 = scmp.ne.s32.totalorder %s207, %s223
    %p225 = scmp.eq.s32.totalorder %s21, 0
    %p226 = por %p224, %p225
    %p227 = scmp.le.s32.totalorder 1, %s15
    %p228 = scmp.lt.s32.totalorder %s15, 3
    %p229 = pnand %p227, %p228
    %p230 = pneg %p229
    // Predicated region
    $region9: #{tpu_custom_call.1} parent=5 // pred_check
      _
    $region10: #{tpu_custom_call.1} parent=5 // pred_check_branch
      %232 = sbr.rel (%p229) target = $region12
    $region11: #{tpu_custom_call.1} parent=5 // pred_region
      %s233 = ssub.s32 %s15, 1
      // Predicated region
      $region13: #{tpu_custom_call.1} parent=11 // pred_check
        %p234 = pneg %p62
      $region14: #{tpu_custom_call.1} parent=11 // pred_check_branch
        %236 = sbr.rel (%p234) target = $region16
      $region15: #{tpu_custom_call.1} parent=11 // pred_region
        _
      $region16: #{tpu_custom_call.1} parent=11 // pred_fallthru
        _
      // Predicated region
      $region17: #{tpu_custom_call.1} parent=11 // pred_check
        %p237 = pneg %p83
      $region18: #{tpu_custom_call.1} parent=11 // pred_check_branch
        %239 = sbr.rel (%p237) target = $region20
      $region19: #{tpu_custom_call.1} parent=11 // pred_region
        _
      $region20: #{tpu_custom_call.1} parent=11 // pred_fallthru
        _
      // Predicated region
      $region21: #{tpu_custom_call.1} parent=11 // pred_check
        %p240 = pneg %p104
      $region22: #{tpu_custom_call.1} parent=11 // pred_check_branch
        %242 = sbr.rel (%p240) target = $region24
      $region23: #{tpu_custom_call.1} parent=11 // pred_region
        _
      $region24: #{tpu_custom_call.1} parent=11 // pred_fallthru
        _
      // Predicated region
      $region25: #{tpu_custom_call.1} parent=11 // pred_check
        %p243 = pneg %p125
      $region26: #{tpu_custom_call.1} parent=11 // pred_check_branch
        %245 = sbr.rel (%p243) target = $region28
      $region27: #{tpu_custom_call.1} parent=11 // pred_region
        _
      $region28: #{tpu_custom_call.1} parent=11 // pred_fallthru
        _
      // Predicated region
      $region29: #{tpu_custom_call.1} parent=11 // pred_check
        %p246 = pneg %p146
      $region30: #{tpu_custom_call.1} parent=11 // pred_check_branch
        %248 = sbr.rel (%p246) target = $region32
      $region31: #{tpu_custom_call.1} parent=11 // pred_region
        _
      $region32: #{tpu_custom_call.1} parent=11 // pred_fallthru
        _
      // Predicated region
      $region33: #{tpu_custom_call.1} parent=11 // pred_check
        %p249 = pneg %p167
      $region34: #{tpu_custom_call.1} parent=11 // pred_check_branch
        %251 = sbr.rel (%p249) target = $region36
      $region35: #{tpu_custom_call.1} parent=11 // pred_region
        _
      $region36: #{tpu_custom_call.1} parent=11 // pred_fallthru
        _
    $region12: #{tpu_custom_call.1} parent=5 // pred_fallthru
      _
    %p252 = scmp.lt.s32.totalorder %s15, 2
    // Predicated region
    $region37: #{tpu_custom_call.1} parent=5 // pred_check
      %p253 = pneg %p252
    $region38: #{tpu_custom_call.1} parent=5 // pred_check_branch
      %255 = sbr.rel (%p253) target = $region40
    $region39: #{tpu_custom_call.1} parent=5 // pred_region
      // Predicated region
      $region41: #{tpu_custom_call.1} parent=39 // pred_check
        %p256 = pneg %p35
      $region42: #{tpu_custom_call.1} parent=39 // pred_check_branch
        %258 = sbr.rel (%p256) target = $region44
      $region43: #{tpu_custom_call.1} parent=39 // pred_region
        %s259 = smul.u32 8, %s15
        %p260 = scmp.lt.s32.totalorder %s259, 15
        %s261 = scalar_select %p260, %s259, 15
        %s262 = smul.addr %s261, 8
        %s263 = scalar_lea.vmem %s0, %s262
        %s264 = smul.u32 8, %s15
      $region44: #{tpu_custom_call.1} parent=39 // pred_fallthru
        _
    $region40: #{tpu_custom_call.1} parent=5 // pred_fallthru
      _
    %p265 = scmp.le.s32.totalorder 1, %s15
    %p266 = scmp.lt.s32.totalorder %s15, 3
    %p267 = pnand %p265, %p266
    %p268 = pneg %p267
    // Predicated region
    $region45: #{tpu_custom_call.1} parent=5 // pred_check
      _
    $region46: #{tpu_custom_call.1} parent=5 // pred_check_branch
      %270 = sbr.rel (%p267) target = $region48
    $region47: #{tpu_custom_call.1} parent=5 // pred_region
      %s271 = ssub.s32 %s15, 1
      %s272 = smul.u32 8, %s20
      %p273 = scmp.lt.s32.totalorder %s272, 15
      %s274 = scalar_select %p273, %s272, 15
      %s275 = smul.addr %s274, 8
      %s276 = scalar_lea.vmem %s0, %s275
      %p277 = pneg %p41
      %p278 = pneg %p38
      %p279 = pneg %p62
      %p280 = pneg %p59
      %p281 = pneg %p83
      %p282 = pneg %p80
      %p283 = pneg %p104
      %p284 = pneg %p101
      %p285 = pneg %p125
      %p286 = pneg %p122
      %p287 = pneg %p146
      %p288 = pneg %p143
      %p289 = pneg %p167
      %p290 = pneg %p164
      %p291 = pneg %p193
      %p292 = pneg %p190
      %s293 = smul.u32 8, %s20
      %p294 = scmp.lt.s32.totalorder %s293, 15
      %s295 = scalar_select %p294, %s293, 15
      %s296 = smul.addr %s295, 8
      %s297 = scalar_lea.vmem %s7, %s296
      %p298 = pneg %p219
      %p299 = pneg %p216
      %s300 = smul.u32 8, %s20
      %p301 = scmp.lt.s32.totalorder %s300, 15
      %s302 = scalar_select %p301, %s300, 15
      %s303 = smul.addr %s302, 8
      %s304 = scalar_lea.vmem %s8, %s303
      %s305 = smul.u32 8, %s20
      %p306 = scmp.lt.s32.totalorder %s305, 15
      %s307 = scalar_select %p306, %s305, 15
      %s308 = smul.addr %s307, 8
      %s309 = scalar_lea.vmem %s0, %s308
      %s310 = smul.u32 8, %s20
      %s311 = smul.u32 8, %s20
      %p312 = scmp.lt.s32.totalorder %s311, 15
      %s313 = scalar_select %p312, %s311, 15
      %s314 = smul.addr %s313, 8
      %s315 = scalar_lea.vmem %s7, %s314
      %s316 = smul.u32 8, %s20
      %s317 = smul.u32 8, %s20
      %p318 = scmp.lt.s32.totalorder %s317, 15
      %s319 = scalar_select %p318, %s317, 15
      %s320 = smul.addr %s319, 8
      %s321 = scalar_lea.vmem %s8, %s320
      %s322 = smul.u32 8, %s20
      %v323 = vld [vmem:[%s309] sm:$0xff]
      %v324 = vld [vmem:[%s309 + $0x8] sm:$0xff]
      %v325 = vld [vmem:[%s309 + $0x10] sm:$0xff]
      %v326 = vld [vmem:[%s309 + $0x18] sm:$0xff]
      %v327 = vld [vmem:[%s309 + $0x20] sm:$0xff]
      %v328 = vld [vmem:[%s309 + $0x28] sm:$0xff]
      %v329 = vld [vmem:[%s309 + $0x30] sm:$0xff]
      %v330 = vld [vmem:[%s309 + $0x38] sm:$0xff]
      %v331 = vld [vmem:[%s1] sm:$0xff]
      %v332 = vld [vmem:[%s1 + $0x8] sm:$0xff]
      %v333 = vld [vmem:[%s1 + $0x10] sm:$0xff]
      %v334 = vld [vmem:[%s1 + $0x18] sm:$0xff]
      %v335 = vld [vmem:[%s1 + $0x20] sm:$0xf]
      %vm336 = vcmask 293888
      %v338 = vsel %vm336, %v323, 0
      %v341 = vsel %vm336, %v324, 0
      %v344 = vsel %vm336, %v325, 0
      %v347 = vsel %vm336, %v326, 0
      %v350 = vsel %vm336, %v327, 0
      %v353 = vsel %vm336, %v328, 0
      %v356 = vsel %vm336, %v329, 0
      %v359 = vsel %vm336, %v330, 0
      %vm361 = vcmask 1043456
      %v363 = vsel %vm361, %v335, 0
      %365 = vmatprep.subr.mxu0 0.0
      %366 = vmatpush1.msra.mxu0 %v331
      %367 = vmatprep.subr.mxu0 0.0
      %368 = vmatpush1.msra.mxu0 %v332
      %369 = vmatprep.subr.mxu0 0.0
      %370 = vmatpush1.msra.mxu0 %v333
      %371 = vmatprep.subr.mxu0 0.0
      %372 = vmatpush1.msra.mxu0 %v334
      %373 = vmatprep.subr.mxu0 0.0
      %374 = vmatpush1.msra.mxu0 %v363
      %375 = vmatprep.subr.mxu0 0.0
      %376 = vmatpush1.msra.mxu0 0.0
      %377 = vmatprep.subr.mxu0 0.0
      %378 = vmatpush1.msra.mxu0 0.0
      %379 = vmatprep.subr.mxu0 0.0
      %380 = vmatpush1.msra.mxu0 0.0
      %381 = vmatprep.subr.mxu0 0.0
      %382 = vmatpush1.msra.mxu0 0.0
      %383 = vmatprep.subr.mxu0 0.0
      %384 = vmatpush1.msra.mxu0 0.0
      %385 = vmatprep.subr.mxu0 0.0
      %386 = vmatpush1.msra.mxu0 0.0
      %387 = vmatprep.subr.mxu0 0.0
      %388 = vmatpush1.msra.mxu0 0.0
      %389 = vmatprep.subr.mxu0 0.0
      %390 = vmatpush1.msra.mxu0 0.0
      %391 = vmatprep.subr.mxu0 0.0
      %392 = vmatpush1.msra.mxu0 0.0
      %393 = vmatprep.subr.mxu0 0.0
      %394 = vmatpush1.msra.mxu0 0.0
      %395 = vmatprep.subr.mxu0 0.0
      %396 = vmatpush1.msra.mxu0 0.0
      %397 = vmatprep.subr.mxu0 0.0
      %398 = vmatpush1.msra.mxu0 0.0
      %399 = vmatprep.subr.mxu0 0.0
      %400 = vmatpush1.msra.mxu0 0.0
      %401 = vmatprep.subr.mxu0 0.0
      %402 = vmatpush1.msra.mxu0 0.0
      %403 = vmatprep.subr.mxu0 0.0
      %404 = vmatpush1.msra.mxu0 0.0
      %405 = vmatprep.subr.mxu0 0.0
      %406 = vmatpush1.msra.mxu0 0.0
      %407 = vmatprep.subr.mxu0 0.0
      %408 = vmatpush1.msra.mxu0 0.0
      %409 = vmatprep.subr.mxu0 0.0
      %410 = vmatpush1.msra.mxu0 0.0
      %411 = vmatprep.subr.mxu0 0.0
      %412 = vmatpush1.msra.mxu0 0.0
      %413 = vmatprep.subr.mxu0 0.0
      %414 = vmatpush1.msra.mxu0 0.0
      %415 = vmatprep.subr.mxu0 0.0
      %416 = vmatpush1.msra.mxu0 0.0
      %417 = vmatprep.subr.mxu0 0.0
      %418 = vmatpush1.msra.mxu0 0.0
      %419 = vmatprep.subr.mxu0 0.0
      %420 = vmatpush1.msra.mxu0 0.0
      %421 = vmatprep.subr.mxu0 0.0
      %422 = vmatpush1.msra.mxu0 0.0
      %423 = vmatprep.subr.mxu0 0.0
      %424 = vmatpush1.msra.mxu0 0.0
      %425 = vmatprep.subr.mxu0 0.0
      %426 = vmatpush1.msra.mxu0 0.0
      %427 = vmatprep.subr.mxu0 0.0
      %428 = vmatpush1.msra.mxu0 0.0
      %429 = vmatprep.mubr.f32.mxu0 0.0
      %430 = vmatmul.mubr.f32.gmra.mrb[0].mxu0 %v338
      %v431 = vpop.f32.mrb[0].mxu0
      %v432 = vadd.f32 0.0, %v431
      %v433 = vpop.f32.mrb[0].mxu0
      %434 = vmatprep.mubr.f32.mxu0 0.0
      %435 = vmatmul.mubr.f32.gmra.mrb[0].mxu0 %v341
      %v436 = vpop.f32.mrb[0].mxu0
      %v437 = vadd.f32 0.0, %v436
      %v438 = vpop.f32.mrb[0].mxu0
      %439 = vmatprep.mubr.f32.mxu0 0.0
      %440 = vmatmul.mubr.f32.gmra.mrb[0].mxu0 %v344
      %v441 = vpop.f32.mrb[0].mxu0
      %v442 = vadd.f32 0.0, %v441
      %v443 = vpop.f32.mrb[0].mxu0
      %444 = vmatprep.mubr.f32.mxu0 0.0
      %445 = vmatmul.mubr.f32.gmra.mrb[0].mxu0 %v347
      %v446 = vpop.f32.mrb[0].mxu0
      %v447 = vadd.f32 0.0, %v446
      %v448 = vpop.f32.mrb[0].mxu0
      %449 = vmatprep.mubr.f32.mxu0 0.0
      %450 = vmatmul.mubr.f32.gmra.mrb[0].mxu0 %v350
      %v451 = vpop.f32.mrb[0].mxu0
      %v452 = vadd.f32 0.0, %v451
      %v453 = vpop.f32.mrb[0].mxu0
      %454 = vmatprep.mubr.f32.mxu0 0.0
      %455 = vmatmul.mubr.f32.gmra.mrb[0].mxu0 %v353
      %v456 = vpop.f32.mrb[0].mxu0
      %v457 = vadd.f32 0.0, %v456
      %v458 = vpop.f32.mrb[0].mxu0
      %459 = vmatprep.mubr.f32.mxu0 0.0
      %460 = vmatmul.mubr.f32.gmra.mrb[0].mxu0 %v356
      %v461 = vpop.f32.mrb[0].mxu0
      %v462 = vadd.f32 0.0, %v461
      %v463 = vpop.f32.mrb[0].mxu0
      %464 = vmatprep.mubr.f32.mxu0 0.0
      %465 = vmatmul.mubr.f32.gmra.mrb[0].mxu0 %v359
      %v466 = vpop.f32.mrb[0].mxu0
      %v467 = vadd.f32 0.0, %v466
      %v468 = vpop.f32.mrb[0].mxu0
      %469 = vdwg.mxu0
      %v470 = vld [vmem:[%s2] sm:$0x1]
      %v472 = vlaneseq
      %v473 = vshrl.u32 %v472, 7
      %v474 = vsub.s32 0, %v473
      %v475 = vrot.slane %v470, %v474
      %v477 = vmul.f32 %v432, %v475
      %v478 = vmul.f32 %v437, %v475
      %v479 = vmul.f32 %v442, %v475
      %v480 = vmul.f32 %v447, %v475
      %v481 = vmul.f32 %v452, %v475
      %v482 = vmul.f32 %v457, %v475
      %v483 = vmul.f32 %v462, %v475
      %v484 = vmul.f32 %v467, %v475
      %v485 = vld [vmem:[%s3] sm:$0x1]
      %v487 = vlaneseq
      %v488 = vshrl.u32 %v487, 7
      %v489 = vsub.s32 0, %v488
      %v490 = vrot.slane %v485, %v489
      %v492 = vadd.f32 %v477, %v490
      %v493 = vadd.f32 %v478, %v490
      %v494 = vadd.f32 %v479, %v490
      %v495 = vadd.f32 %v480, %v490
      %v496 = vadd.f32 %v481, %v490
      %v497 = vadd.f32 %v482, %v490
      %v498 = vadd.f32 %v483, %v490
      %v499 = vadd.f32 %v484, %v490
      %v500 = vxor.u32 %v492, 2147483648
      %v501 = vxor.u32 %v493, 2147483648
      %v502 = vxor.u32 %v494, 2147483648
      %v503 = vxor.u32 %v495, 2147483648
      %v504 = vxor.u32 %v496, 2147483648
      %v505 = vxor.u32 %v497, 2147483648
      %v506 = vxor.u32 %v498, 2147483648
      %v507 = vxor.u32 %v499, 2147483648
      %v508 = vmul.f32 %v500, 1.442695
      %v509 = vpow.pop %v508
      %v510 = vmul.f32 %v501, 1.442695
      %v511 = vpow.pop %v510
      %v512 = vmul.f32 %v502, 1.442695
      %v513 = vpow.pop %v512
      %v514 = vmul.f32 %v503, 1.442695
      %v515 = vpow.pop %v514
      %v516 = vmul.f32 %v504, 1.442695
      %v517 = vpow.pop %v516
      %v518 = vmul.f32 %v505, 1.442695
      %v519 = vpow.pop %v518
      %v520 = vmul.f32 %v506, 1.442695
      %v521 = vpow.pop %v520
      %v522 = vmul.f32 %v507, 1.442695
      %v523 = vpow.pop %v522
      %v524 = vadd.f32 %v509, 1.0
      %v525 = vadd.f32 %v511, 1.0
      %v526 = vadd.f32 %v513, 1.0
      %v527 = vadd.f32 %v515, 1.0
      %v528 = vadd.f32 %v517, 1.0
      %v529 = vadd.f32 %v519, 1.0
      %v530 = vadd.f32 %v521, 1.0
      %v531 = vadd.f32 %v523, 1.0
      %v532 = vrcp.pop %v524
      %v533 = vmul.f32 1.0, %v532
      %v534 = vrcp.pop %v525
      %v535 = vmul.f32 1.0, %v534
      %v536 = vrcp.pop %v526
      %v537 = vmul.f32 1.0, %v536
      %v538 = vrcp.pop %v527
      %v539 = vmul.f32 1.0, %v538
      %v540 = vrcp.pop %v528
      %v541 = vmul.f32 1.0, %v540
      %v542 = vrcp.pop %v529
      %v543 = vmul.f32 1.0, %v542
      %v544 = vrcp.pop %v530
      %v545 = vmul.f32 1.0, %v544
      %v546 = vrcp.pop %v531
      %v547 = vmul.f32 1.0, %v546
      %v548 = vmul.f32 %v492, %v533
      %v549 = vmul.f32 %v493, %v535
      %v550 = vmul.f32 %v494, %v537
      %v551 = vmul.f32 %v495, %v539
      %v552 = vmul.f32 %v496, %v541
      %v553 = vmul.f32 %v497, %v543
      %v554 = vmul.f32 %v498, %v545
      %v555 = vmul.f32 %v499, %v547
      %vm556 = vcmask 130048
      %557 = vst.msk [vmem:[%s315] sm:$0xff] %vm556, %v548
      %558 = vst.msk [vmem:[%s315 + $0x8] sm:$0xff] %vm556, %v549
      %559 = vst.msk [vmem:[%s315 + $0x10] sm:$0xff] %vm556, %v550
      %560 = vst.msk [vmem:[%s315 + $0x18] sm:$0xff] %vm556, %v551
      %561 = vst.msk [vmem:[%s315 + $0x20] sm:$0xff] %vm556, %v552
      %562 = vst.msk [vmem:[%s315 + $0x28] sm:$0xff] %vm556, %v553
      %563 = vst.msk [vmem:[%s315 + $0x30] sm:$0xff] %vm556, %v554
      %564 = vst.msk [vmem:[%s315 + $0x38] sm:$0xff] %vm556, %v555
      %v565 = vld [vmem:[%s4] sm:$0xff]
      %v566 = vld [vmem:[%s4 + $0x8] sm:$0xff]
      %v568 = vsel %vm556, %v548, 0
      %v571 = vsel %vm556, %v549, 0
      %v574 = vsel %vm556, %v550, 0
      %v577 = vsel %vm556, %v551, 0
      %v580 = vsel %vm556, %v552, 0
      %v583 = vsel %vm556, %v553, 0
      %v586 = vsel %vm556, %v554, 0
      %v589 = vsel %vm556, %v555, 0
      %591 = vmatprep.subr.mxu0 0.0
      %592 = vmatpush1.msra.mxu0 %v565
      %593 = vmatprep.subr.mxu0 0.0
      %594 = vmatpush1.msra.mxu0 %v566
      %595 = vmatprep.subr.mxu0 0.0
      %596 = vmatpush1.msra.mxu0 0.0
      %597 = vmatprep.subr.mxu0 0.0
      %598 = vmatpush1.msra.mxu0 0.0
      %599 = vmatprep.subr.mxu0 0.0
      %600 = vmatpush1.msra.mxu0 0.0
      %601 = vmatprep.subr.mxu0 0.0
      %602 = vmatpush1.msra.mxu0 0.0
      %603 = vmatprep.subr.mxu0 0.0
      %604 = vmatpush1.msra.mxu0 0.0
      %605 = vmatprep.subr.mxu0 0.0
      %606 = vmatpush1.msra.mxu0 0.0
      %607 = vmatprep.subr.mxu0 0.0
      %608 = vmatpush1.msra.mxu0 0.0
      %609 = vmatprep.subr.mxu0 0.0
      %610 = vmatpush1.msra.mxu0 0.0
      %611 = vmatprep.subr.mxu0 0.0
      %612 = vmatpush1.msra.mxu0 0.0
      %613 = vmatprep.subr.mxu0 0.0
      %614 = vmatpush1.msra.mxu0 0.0
      %615 = vmatprep.subr.mxu0 0.0
      %616 = vmatpush1.msra.mxu0 0.0
      %617 = vmatprep.subr.mxu0 0.0
      %618 = vmatpush1.msra.mxu0 0.0
      %619 = vmatprep.subr.mxu0 0.0
      %620 = vmatpush1.msra.mxu0 0.0
      %621 = vmatprep.subr.mxu0 0.0
      %622 = vmatpush1.msra.mxu0 0.0
      %623 = vmatprep.subr.mxu0 0.0
      %624 = vmatpush1.msra.mxu0 0.0
      %625 = vmatprep.subr.mxu0 0.0
      %626 = vmatpush1.msra.mxu0 0.0
      %627 = vmatprep.subr.mxu0 0.0
      %628 = vmatpush1.msra.mxu0 0.0
      %629 = vmatprep.subr.mxu0 0.0
      %630 = vmatpush1.msra.mxu0 0.0
      %631 = vmatprep.subr.mxu0 0.0
      %632 = vmatpush1.msra.mxu0 0.0
      %633 = vmatprep.subr.mxu0 0.0
      %634 = vmatpush1.msra.mxu0 0.0
      %635 = vmatprep.subr.mxu0 0.0
      %636 = vmatpush1.msra.mxu0 0.0
      %637 = vmatprep.subr.mxu0 0.0
      %638 = vmatpush1.msra.mxu0 0.0
      %639 = vmatprep.subr.mxu0 0.0
      %640 = vmatpush1.msra.mxu0 0.0
      %641 = vmatprep.subr.mxu0 0.0
      %642 = vmatpush1.msra.mxu0 0.0
      %643 = vmatprep.subr.mxu0 0.0
      %644 = vmatpush1.msra.mxu0 0.0
      %645 = vmatprep.subr.mxu0 0.0
      %646 = vmatpush1.msra.mxu0 0.0
      %647 = vmatprep.subr.mxu0 0.0
      %648 = vmatpush1.msra.mxu0 0.0
      %649 = vmatprep.subr.mxu0 0.0
      %650 = vmatpush1.msra.mxu0 0.0
      %651 = vmatprep.subr.mxu0 0.0
      %652 = vmatpush1.msra.mxu0 0.0
      %653 = vmatprep.subr.mxu0 0.0
      %654 = vmatpush1.msra.mxu0 0.0
      %655 = vmatprep.mubr.f32.mxu0 0.0
      %656 = vmatmul.mubr.f32.gmra.mrb[0].mxu0 %v568
      %v657 = vpop.f32.mrb[0].mxu0
      %v658 = vadd.f32 0.0, %v657
      %v659 = vpop.f32.mrb[0].mxu0
      %660 = vmatprep.mubr.f32.mxu0 0.0
      %661 = vmatmul.mubr.f32.gmra.mrb[0].mxu0 %v571
      %v662 = vpop.f32.mrb[0].mxu0
      %v663 = vadd.f32 0.0, %v662
      %v664 = vpop.f32.mrb[0].mxu0
      %665 = vmatprep.mubr.f32.mxu0 0.0
      %666 = vmatmul.mubr.f32.gmra.mrb[0].mxu0 %v574
      %v667 = vpop.f32.mrb[0].mxu0
      %v668 = vadd.f32 0.0, %v667
      %v669 = vpop.f32.mrb[0].mxu0
      %670 = vmatprep.mubr.f32.mxu0 0.0
      %671 = vmatmul.mubr.f32.gmra.mrb[0].mxu0 %v577
      %v672 = vpop.f32.mrb[0].mxu0
      %v673 = vadd.f32 0.0, %v672
      %v674 = vpop.f32.mrb[0].mxu0
      %675 = vmatprep.mubr.f32.mxu0 0.0
      %676 = vmatmul.mubr.f32.gmra.mrb[0].mxu0 %v580
      %v677 = vpop.f32.mrb[0].mxu0
      %v678 = vadd.f32 0.0, %v677
      %v679 = vpop.f32.mrb[0].mxu0
      %680 = vmatprep.mubr.f32.mxu0 0.0
      %681 = vmatmul.mubr.f32.gmra.mrb[0].mxu0 %v583
      %v682 = vpop.f32.mrb[0].mxu0
      %v683 = vadd.f32 0.0, %v682
      %v684 = vpop.f32.mrb[0].mxu0
      %685 = vmatprep.mubr.f32.mxu0 0.0
      %686 = vmatmul.mubr.f32.gmra.mrb[0].mxu0 %v586
      %v687 = vpop.f32.mrb[0].mxu0
      %v688 = vadd.f32 0.0, %v687
      %v689 = vpop.f32.mrb[0].mxu0
      %690 = vmatprep.mubr.f32.mxu0 0.0
      %691 = vmatmul.mubr.f32.gmra.mrb[0].mxu0 %v589
      %v692 = vpop.f32.mrb[0].mxu0
      %v693 = vadd.f32 0.0, %v692
      %v694 = vpop.f32.mrb[0].mxu0
      %695 = vdwg.mxu0
      %v696 = vld [vmem:[%s5] sm:$0x1]
      %v698 = vlaneseq
      %v699 = vshrl.u32 %v698, 7
      %v700 = vsub.s32 0, %v699
      %v701 = vrot.slane %v696, %v700
      %v703 = vmul.f32 %v658, %v701
      %v704 = vmul.f32 %v663, %v701
      %v705 = vmul.f32 %v668, %v701
      %v706 = vmul.f32 %v673, %v701
      %v707 = vmul.f32 %v678, %v701
      %v708 = vmul.f32 %v683, %v701
      %v709 = vmul.f32 %v688, %v701
      %v710 = vmul.f32 %v693, %v701
      %v711 = vld [vmem:[%s6] sm:$0x1]
      %v713 = vlaneseq
      %v714 = vshrl.u32 %v713, 7
      %v715 = vsub.s32 0, %v714
      %v716 = vrot.slane %v711, %v715
      %v718 = vadd.f32 %v703, %v716
      %v719 = vadd.f32 %v704, %v716
      %v720 = vadd.f32 %v705, %v716
      %v721 = vadd.f32 %v706, %v716
      %v722 = vadd.f32 %v707, %v716
      %v723 = vadd.f32 %v708, %v716
      %v724 = vadd.f32 %v709, %v716
      %v725 = vadd.f32 %v710, %v716
      %v726 = vxor.u32 %v718, 2147483648
      %v727 = vxor.u32 %v719, 2147483648
      %v728 = vxor.u32 %v720, 2147483648
      %v729 = vxor.u32 %v721, 2147483648
      %v730 = vxor.u32 %v722, 2147483648
      %v731 = vxor.u32 %v723, 2147483648
      %v732 = vxor.u32 %v724, 2147483648
      %v733 = vxor.u32 %v725, 2147483648
      %v734 = vmul.f32 %v726, 1.442695
      %v735 = vpow.pop %v734
      %v736 = vmul.f32 %v727, 1.442695
      %v737 = vpow.pop %v736
      %v738 = vmul.f32 %v728, 1.442695
      %v739 = vpow.pop %v738
      %v740 = vmul.f32 %v729, 1.442695
      %v741 = vpow.pop %v740
      %v742 = vmul.f32 %v730, 1.442695
      %v743 = vpow.pop %v742
      %v744 = vmul.f32 %v731, 1.442695
      %v745 = vpow.pop %v744
      %v746 = vmul.f32 %v732, 1.442695
      %v747 = vpow.pop %v746
      %v748 = vmul.f32 %v733, 1.442695
      %v749 = vpow.pop %v748
      %v750 = vadd.f32 %v735, 1.0
      %v751 = vadd.f32 %v737, 1.0
      %v752 = vadd.f32 %v739, 1.0
      %v753 = vadd.f32 %v741, 1.0
      %v754 = vadd.f32 %v743, 1.0
      %v755 = vadd.f32 %v745, 1.0
      %v756 = vadd.f32 %v747, 1.0
      %v757 = vadd.f32 %v749, 1.0
      %v758 = vrcp.pop %v750
      %v759 = vmul.f32 1.0, %v758
      %v760 = vrcp.pop %v751
      %v761 = vmul.f32 1.0, %v760
      %v762 = vrcp.pop %v752
      %v763 = vmul.f32 1.0, %v762
      %v764 = vrcp.pop %v753
      %v765 = vmul.f32 1.0, %v764
      %v766 = vrcp.pop %v754
      %v767 = vmul.f32 1.0, %v766
      %v768 = vrcp.pop %v755
      %v769 = vmul.f32 1.0, %v768
      %v770 = vrcp.pop %v756
      %v771 = vmul.f32 1.0, %v770
      %v772 = vrcp.pop %v757
      %v773 = vmul.f32 1.0, %v772
      %v774 = vmul.f32 %v718, %v759
      %v775 = vmul.f32 %v719, %v761
      %v776 = vmul.f32 %v720, %v763
      %v777 = vmul.f32 %v721, %v765
      %v778 = vmul.f32 %v722, %v767
      %v779 = vmul.f32 %v723, %v769
      %v780 = vmul.f32 %v724, %v771
      %v781 = vmul.f32 %v725, %v773
      %782 = vst.msk [vmem:[%s321] sm:$0xff] %vm556, %v774
      %783 = vst.msk [vmem:[%s321 + $0x8] sm:$0xff] %vm556, %v775
      %784 = vst.msk [vmem:[%s321 + $0x10] sm:$0xff] %vm556, %v776
      %785 = vst.msk [vmem:[%s321 + $0x18] sm:$0xff] %vm556, %v777
      %786 = vst.msk [vmem:[%s321 + $0x20] sm:$0xff] %vm556, %v778
      %787 = vst.msk [vmem:[%s321 + $0x28] sm:$0xff] %vm556, %v779
      %788 = vst.msk [vmem:[%s321 + $0x30] sm:$0xff] %vm556, %v780
      %789 = vst.msk [vmem:[%s321 + $0x38] sm:$0xff] %vm556, %v781
      %s790 = smul.u32 8, %s20
      %p791 = scmp.lt.s32.totalorder %s790, 15
      %s792 = scalar_select %p791, %s790, 15
      %s793 = smul.addr %s792, 8
      %s794 = scalar_lea.vmem %s7, %s793
      %s795 = smul.u32 8, %s20
      %p796 = scmp.lt.s32.totalorder %s795, 15
      %s797 = scalar_select %p796, %s795, 15
      %s798 = smul.addr %s797, 8
      %s799 = scalar_lea.vmem %s8, %s798
      // Predicated region
      $region49: #{tpu_custom_call.1} parent=47 // pred_check
        %p800 = pneg %p190
      $region50: #{tpu_custom_call.1} parent=47 // pred_check_branch
        %802 = sbr.rel (%p800) target = $region52
      $region51: #{tpu_custom_call.1} parent=47 // pred_region
        %s803 = smul.u32 8, %s20
      $region52: #{tpu_custom_call.1} parent=47 // pred_fallthru
        _
      // Predicated region
      $region53: #{tpu_custom_call.1} parent=47 // pred_check
        %p804 = pneg %p216
      $region54: #{tpu_custom_call.1} parent=47 // pred_check_branch
        %806 = sbr.rel (%p804) target = $region56
      $region55: #{tpu_custom_call.1} parent=47 // pred_region
        %s807 = smul.u32 8, %s20
      $region56: #{tpu_custom_call.1} parent=47 // pred_fallthru
        _
    $region48: #{tpu_custom_call.1} parent=5 // pred_fallthru
      _
    %p808 = scmp.le.s32.totalorder 2, %s15
    // Predicated region
    $region57: #{tpu_custom_call.1} parent=5 // pred_check
      %p809 = pneg %p808
    $region58: #{tpu_custom_call.1} parent=5 // pred_check_branch
      %811 = sbr.rel (%p809) target = $region60
    $region59: #{tpu_custom_call.1} parent=5 // pred_region
      %s812 = ssub.s32 %s15, 2
      // Predicated region
      $region61: #{tpu_custom_call.1} parent=59 // pred_check
        %p813 = pneg %p196
      $region62: #{tpu_custom_call.1} parent=59 // pred_check_branch
        %815 = sbr.rel (%p813) target = $region64
      $region63: #{tpu_custom_call.1} parent=59 // pred_region
        %s816 = smul.u32 8, %s21
        %p817 = scmp.lt.s32.totalorder %s816, 15
        %s818 = scalar_select %p817, %s816, 15
        %s819 = smul.addr %s818, 8
        %s820 = scalar_lea.vmem %s7, %s819
      $region64: #{tpu_custom_call.1} parent=59 // pred_fallthru
        _
      // Predicated region
      $region65: #{tpu_custom_call.1} parent=59 // pred_check
        %p821 = pneg %p222
      $region66: #{tpu_custom_call.1} parent=59 // pred_check_branch
        %823 = sbr.rel (%p821) target = $region68
      $region67: #{tpu_custom_call.1} parent=59 // pred_region
        %s824 = smul.u32 8, %s21
        %p825 = scmp.lt.s32.totalorder %s824, 15
        %s826 = scalar_select %p825, %s824, 15
        %s827 = smul.addr %s826, 8
        %s828 = scalar_lea.vmem %s8, %s827
      $region68: #{tpu_custom_call.1} parent=59 // pred_fallthru
        _
    $region60: #{tpu_custom_call.1} parent=5 // pred_fallthru
      _
  $region6: #{tpu_custom_call.1} parent=0 // loop_footer
    %s19 = sadd.s32 1, %s15
  $region7: #{tpu_custom_call.1} parent=0 // loop_footer_branch
    %14 = sbr.rel target = $region3
  $region8: #{tpu_custom_call.1} parent=0 // loop_exit
    _

</llo_original>
